<compile_context>
chip_gen: v7x
topology: tpu7x:2x2x1
jax: 0.10.0
libtpu: 0.0.40
codegen_flags: <defaults>
</compile_context>

<pallas_src>
import functools

import jax
import jax.numpy as jnp
from jax import lax
from jax.experimental import pallas as pl
from jax.experimental.pallas import tpu as pltpu


def _local_soft_argmin_kernel(cost_ref, out_ref, *, radius, radius_dilation,
                              start_disp, dilation, alpha, use_mxu):
    # cost_ref block: (D, TILE_HW); out_ref block: (1, TILE_HW)
    c = cost_ref[...].astype(jnp.float32)            # per-tile upcast (bf16-safe)
    D, T = c.shape

    d_iota = lax.broadcasted_iota(jnp.int32, (D, T), 0)

    # argmax over the disparity axis (first occurrence, matching torch.argmax).
    cmax = jnp.max(c, axis=0, keepdims=True)                          # (1, T)
    max_idx = jnp.min(jnp.where(c == cmax, d_iota, D), axis=0,
                      keepdims=True)                                  # (1, T) int32

    # Local-window membership: d in {argmax + k*radius_dilation, |k| <= radius}.
    # Offsets the module clips to [0, D-1] get logit -10000*alpha there, which
    # underflows to probability 0, so dropping them here is equivalent.
    rel = d_iota - max_idx                                            # (D, T)
    if radius_dilation == 1:
        in_window = jnp.abs(rel) <= radius
    else:
        # OR of 2*radius+1 exact compares instead of an integer modulo chain.
        in_window = rel == 0
        for k in range(1, radius + 1):
            off = k * radius_dilation
            in_window = in_window | (rel == off) | (rel == -off)

    neg = jnp.float32(-1e30)                                          # exp() -> 0
    if alpha > 0:
        # The window max logit is alpha*cmax (offset 0 is the argmax itself),
        # so no second max reduction is needed.
        z = (c - cmax) * jnp.float32(alpha)
    else:
        # Fallback for alpha <= 0: the window max is not at the argmax.
        zl = jnp.where(in_window, c * jnp.float32(alpha), neg)
        zmax = jnp.max(zl, axis=0, keepdims=True)
        z = c * jnp.float32(alpha) - zmax
    e = jnp.exp(jnp.where(in_window, z, neg))                         # (D, T), EUP

    if use_mxu:
        # v7x path (VALU-bound there; MXU otherwise idle): one (8, D) x (D, T)
        # matmul yields both reductions -- row 0 = ones -> denom, row 1 =
        # dilation * d -> dilation-scaled numerator.  fp32 contract precision
        # keeps f32 accuracy; lanes are never mixed (contraction is over D),
        # so ragged overhang lanes stay isolated.
        row = lax.broadcasted_iota(jnp.int32, (8, D), 0)
        col = lax.broadcasted_iota(jnp.int32, (8, D), 1).astype(jnp.float32)
        weights = jnp.where(row == 0, jnp.float32(1.0),
                            jnp.where(row == 1, col * jnp.float32(dilation),
                                      jnp.float32(0.0)))
        red = jnp.dot(weights, e, preferred_element_type=jnp.float32,
                      precision=jax.lax.Precision.HIGHEST)            # (8, T)
        denom = red[0:1, :]
        num_scaled = red[1:2, :]
    else:
        # v5e/v6e path (HBM-bound; the sublane reductions hide under the DMA).
        denom = jnp.sum(e, axis=0, keepdims=True)                     # (1, T)
        num_scaled = jnp.sum(e * d_iota.astype(jnp.float32), axis=0,
                             keepdims=True) * jnp.float32(dilation)   # (1, T)

    # Reciprocal-multiply on the (1, T) denom; exact form (approx=True would
    # cost accuracy since disparity values scale the relative error).
    inv = pl.reciprocal(denom, approx=False)
    disp = jnp.float32(start_disp) + num_scaled * inv
    out_ref[...] = disp.astype(out_ref.dtype)


def _tpu_generation():
    """Best-effort TPU generation from device_kind (0 if unknown)."""
    try:
        kind = jax.devices()[0].device_kind.lower()
    except Exception:
        return 0
    for gen in (7, 6, 5, 4):
        if f"v{gen}" in kind or f"tpu{gen}" in kind:
            return gen
    return 0


def _vmem_capacity_bytes():
    """Physical per-core VMEM; falls back to conservative per-gen defaults."""
    try:
        return int(pltpu.get_tpu_info().vmem_capacity_bytes)
    except Exception:
        gen = _tpu_generation()
        if gen in (5, 6):
            return 128 * 1024 * 1024
        return 64 * 1024 * 1024          # v7x (and unknown: be conservative)


def _per_lane_bytes(D, in_itemsize):
    # Working set per HW lane: 2 double-buffered input block rows plus ~4 live
    # f32 (D, TILE) temporaries (upcast / rel / mask / exp) plus small rows.
    return 2 * D * in_itemsize + 4 * D * 4 + 64


def _choose_tile_hw(D, HW, in_itemsize, vmem_cap):
    budget = min(int(vmem_cap * 0.45), 48 * 1024 * 1024)
    tile = (budget // _per_lane_bytes(D, in_itemsize)) // 128 * 128
    tile = max(128, min(tile, 65536))
    tile = min(tile, -(-HW // 128) * 128)
    # A single full-extent block is always legal (block dim == full array dim).
    return HW if tile >= HW else tile


def _vmem_limit_bytes(D, tile, in_itemsize, vmem_cap):
    working_set = tile * _per_lane_bytes(D, in_itemsize)
    return int(min(vmem_cap * 3 // 4,
                   max(32 * 1024 * 1024, working_set + 16 * 1024 * 1024)))


def local_soft_argmin(cost_volume, *, max_disp, radius, start_disp=0,
                      dilation=1, radius_dilation=1, alpha=1.0,
                      normalize=True, tile_hw=None, out_dtype=None,
                      use_mxu_reductions=None):
    """cost_volume: [B, D, H, W] (f32 or bf16) -> disp_map: [B, 1, H, W].

    Matches the PyTorch module for alpha >= ~1e-2, where the module's
    -10000*alpha out-of-window logit underflows to probability 0 in float32.
    For |alpha| < ~1e-3 (and alpha <= 0) the module assigns non-zero
    probability to clipped offsets and results will diverge.

    Perf note: keep the cost volume in bf16 upstream if possible -- the kernel
    upcasts per tile, and halving the HBM stream is the biggest lever on
    v5e/v6e.  Output dtype defaults to the input dtype (module semantics).
    """
    del normalize  # cost volume is always softmax-normalized, as in the module
    B, D, H, W = cost_volume.shape
    disp_sample_number = (max_disp + dilation - 1) // dilation
    assert D == disp_sample_number, (
        "Number of disparity sample should be same with predicted disparity "
        "number in cost volume!")

    HW = H * W
    cost_flat = cost_volume.reshape(B, D, HW)
    out_dtype = cost_volume.dtype if out_dtype is None else jnp.dtype(out_dtype)
    in_itemsize = cost_volume.dtype.itemsize

    if use_mxu_reductions is None:
        # MXU reductions only pay off where the kernel is VALU-bound (v7x);
        # on HBM-bound v5e/v6e the sublane sums hide under the DMA.
        use_mxu_reductions = _tpu_generation() >= 7

    vmem_cap = _vmem_capacity_bytes()
    if tile_hw is None:
        tile_hw = _choose_tile_hw(D, HW, in_itemsize, vmem_cap)
    vmem_limit = _vmem_limit_bytes(D, tile_hw, in_itemsize, vmem_cap)
    num_tiles = pl.cdiv(HW, tile_hw)

    kernel = functools.partial(
        _local_soft_argmin_kernel,
        radius=radius, radius_dilation=radius_dilation,
        start_disp=start_disp, dilation=dilation, alpha=float(alpha),
        use_mxu=bool(use_mxu_reductions))

    cost_estimate = pl.CostEstimate(
        flops=int(10 * B * D * HW),
        transcendentals=int(B * D * HW),
        bytes_accessed=int(B * D * HW * in_itemsize
                           + B * HW * jnp.dtype(out_dtype).itemsize))

    out_flat = pl.pallas_call(
        kernel,
        out_shape=jax.ShapeDtypeStruct((B, 1, HW), out_dtype),
        grid_spec=pltpu.PrefetchScalarGridSpec(
            num_scalar_prefetch=0,
            grid=(B, num_tiles),
            # Leading `None` squeezes the batch dim out of the kernel refs, so
            # the kernel sees (D, TILE_HW) / (1, TILE_HW) directly.  The last
            # HW tile may be ragged: every column is independent and overhang
            # output lanes are masked on store, so no wrapper-side pad/slice
            # (and no extra HBM copy of the cost volume) is needed.
            in_specs=[pl.BlockSpec((None, D, tile_hw), lambda b, t: (b, 0, t))],
            out_specs=pl.BlockSpec((None, 1, tile_hw), lambda b, t: (b, 0, t)),
        ),
        compiler_params=pltpu.CompilerParams(
            # Both axes independent -> shard across the 2 TCs on v7x; no-op on
            # single-core v5e/v6e.
            dimension_semantics=("parallel", "parallel"),
            vmem_limit_bytes=vmem_limit,
        ),
        cost_estimate=cost_estimate,
    )(cost_flat)

    return out_flat.reshape(B, 1, H, W)


def _reference_local_soft_argmin(cost_volume, *, max_disp, radius,
                                 start_disp=0, dilation=1, radius_dilation=1,
                                 alpha=1.0):
    """Pure-JAX reference mirroring the PyTorch forward."""
    B, D, H, W = cost_volume.shape
    max_index = jnp.argmax(cost_volume, axis=1, keepdims=True)          # (B,1,H,W)
    interval = jnp.linspace(-radius * radius_dilation,
                            radius * radius_dilation,
                            2 * radius + 1).astype(jnp.int32)           # (K,)
    interval = interval[None, :, None, None]                            # (1,K,1,1)
    index_group = max_index + interval                                  # (B,K,H,W)
    mask = ((index_group >= 0) & (index_group <= D - 1)).astype(cost_volume.dtype)
    index_group = jnp.clip(index_group, 0, D - 1)
    gathered = jnp.take_along_axis(cost_volume, index_group, axis=1)
    disp_sample = start_disp + index_group.astype(cost_volume.dtype) * dilation
    gathered = gathered * alpha
    logits = gathered * mask + (1.0 - mask) * (-10000.0 * alpha)
    prob = jax.nn.softmax(logits, axis=1)
    return jnp.sum(prob * disp_sample, axis=1, keepdims=True)


if __name__ == "__main__":
    key = jax.random.PRNGKey(0)

    configs = [
        # (max_disp, radius, start_disp, dilation, radius_dilation, alpha,
        #  B, H, W, dtype, tile_hw, out_dtype)
        (16, 2, 0, 1, 1, 1.0, 2, 16, 16, jnp.float32, None, None),   # basic
        (16, 1, 1, 2, 2, 2.0, 2, 10, 12, jnp.float32, None, None),   # dilated, HW<128
        # bf16 HBM stream (v5e/v6e lever) + forced small tile to exercise the
        # ragged (non-divisible) last block that replaced the jnp.pad copy.
        (24, 2, 0, 1, 1, 1.0, 2, 20, 20, jnp.bfloat16, 128, jnp.float32),
    ]

    for (max_disp, radius, start_disp, dilation, radius_dilation, alpha,
         B, H, W, dtype, tile_hw, out_dtype) in configs:
        D = (max_disp + dilation - 1) // dilation
        key, sub = jax.random.split(key)
        cost_volume = jax.random.normal(sub, (B, D, H, W),
                                        dtype=jnp.float32).astype(dtype)

        disp_map = local_soft_argmin(
            cost_volume, max_disp=max_disp, radius=radius,
            start_disp=start_disp, dilation=dilation,
            radius_dilation=radius_dilation, alpha=alpha,
            tile_hw=tile_hw, out_dtype=out_dtype)
        disp_map = jax.block_until_ready(disp_map)

        ref = _reference_local_soft_argmin(
            cost_volume.astype(jnp.float32), max_disp=max_disp, radius=radius,
            start_disp=start_disp, dilation=dilation,
            radius_dilation=radius_dilation, alpha=alpha)

        assert disp_map.shape == (B, 1, H, W)
        err = float(jnp.max(jnp.abs(disp_map.astype(jnp.float32) - ref)))
        assert err < 1e-4, f"max abs err {err} for config D={D}"

    # Opportunistic smoke test of the v7x-targeted MXU-reduction path (it is
    # only auto-selected on generation >= 7).  It is an optional fast path, so
    # it is skipped silently if the local generation cannot lower/run it.
    try:
        key, sub = jax.random.split(key)
        cv = jax.random.normal(sub, (2, 16, 16, 16), dtype=jnp.float32)
        d_mxu = jax.block_until_ready(local_soft_argmin(
            cv, max_disp=16, radius=2, use_mxu_reductions=True))
        ref_mxu = _reference_local_soft_argmin(cv, max_disp=16, radius=2)
        assert float(jnp.max(jnp.abs(d_mxu - ref_mxu))) < 1e-3
    except Exception:  # pragma: no cover - optional path off-v7x
        pass

    print("KERNEL_OK")
</pallas_src>

<mosaic_0001>
module attributes {stable_mosaic.version = 11 : i64} {
  func.func @_local_soft_argmin_kernel(%arg0: i32, %arg1: i32, %arg2: memref<1x16x256xf32, #tpu.memory_space<vmem>>, %arg3: memref<1x1x256xf32, #tpu.memory_space<vmem>>) attributes {dimension_semantics = [#tpu.dimension_semantics<parallel>, #tpu.dimension_semantics<parallel>], iteration_bounds = array<i64: 2, 1>, scalar_prefetch = 0 : i64, scratch_operands = 0 : i64, tpu.core_type = #tpu.core_type<tc>, window_params = [{transform_indices = @transform_0, window_bounds = array<i64: 1, 16, 256>}, {transform_indices = @transform_1, window_bounds = array<i64: 1, 1, 256>}]} {
    %c0 = arith.constant 0 : index
    %c0_0 = arith.constant 0 : index
    %c0_1 = arith.constant 0 : index
    %0 = vector.load %arg2[%c0, %c0_0, %c0_1] : memref<1x16x256xf32, #tpu.memory_space<vmem>>, vector<1x16x256xf32>
    %1 = vector.shape_cast %0 : vector<1x16x256xf32> to vector<16x256xf32>
    %2 = tpu.iota {dimensions = array<i32: 0>} : vector<16x256xi32>
    %cst = arith.constant dense<0xFF800000> : vector<256xf32>
    %3 = vector.multi_reduction <maximumf>, %1, %cst [0] : vector<16x256xf32> to vector<256xf32>
    %4 = vector.shape_cast %3 : vector<256xf32> to vector<1x256xf32>
    %5 = vector.broadcast %4 : vector<1x256xf32> to vector<16x256xf32>
    %6 = arith.cmpf oeq, %1, %5 : vector<16x256xf32>
    %c16_i32 = arith.constant 16 : i32
    %7 = vector.broadcast %c16_i32 : i32 to vector<16x256xi32>
    %8 = arith.select %6, %2, %7 : vector<16x256xi1>, vector<16x256xi32>
    %cst_2 = arith.constant dense<2147483647> : vector<256xi32>
    %9 = vector.multi_reduction <minsi>, %8, %cst_2 [0] : vector<16x256xi32> to vector<256xi32>
    %10 = vector.shape_cast %9 : vector<256xi32> to vector<1x256xi32>
    %11 = vector.broadcast %10 : vector<1x256xi32> to vector<16x256xi32>
    %12 = arith.subi %2, %11 : vector<16x256xi32>
    %13 = math.absi %12 : vector<16x256xi32>
    %c2_i32 = arith.constant 2 : i32
    %14 = vector.broadcast %c2_i32 : i32 to vector<16x256xi32>
    %15 = arith.cmpi sle, %13, %14 : vector<16x256xi32>
    %16 = vector.broadcast %4 : vector<1x256xf32> to vector<16x256xf32>
    %17 = arith.subf %1, %16 : vector<16x256xf32>
    %cst_3 = arith.constant 1.000000e+00 : f32
    %18 = vector.broadcast %cst_3 : f32 to vector<16x256xf32>
    %19 = arith.mulf %17, %18 : vector<16x256xf32>
    %cst_4 = arith.constant -1.000000e+30 : f32
    %20 = vector.broadcast %cst_4 : f32 to vector<16x256xf32>
    %21 = arith.select %15, %19, %20 : vector<16x256xi1>, vector<16x256xf32>
    %22 = math.exp %21 : vector<16x256xf32>
    %cst_5 = arith.constant dense<0.000000e+00> : vector<256xf32>
    %23 = vector.multi_reduction <add>, %22, %cst_5 [0] : vector<16x256xf32> to vector<256xf32>
    %24 = vector.shape_cast %23 : vector<256xf32> to vector<1x256xf32>
    %25 = arith.sitofp %2 : vector<16x256xi32> to vector<16x256xf32>
    %26 = arith.mulf %22, %25 : vector<16x256xf32>
    %cst_6 = arith.constant dense<0.000000e+00> : vector<256xf32>
    %27 = vector.multi_reduction <add>, %26, %cst_6 [0] : vector<16x256xf32> to vector<256xf32>
    %28 = vector.shape_cast %27 : vector<256xf32> to vector<1x256xf32>
    %cst_7 = arith.constant 1.000000e+00 : f32
    %29 = vector.broadcast %cst_7 : f32 to vector<1x256xf32>
    %30 = arith.mulf %28, %29 : vector<1x256xf32>
    %31 = tpu.reciprocal %24 : vector<1x256xf32> -> vector<1x256xf32>
    %32 = arith.mulf %30, %31 : vector<1x256xf32>
    %cst_8 = arith.constant 0.000000e+00 : f32
    %33 = vector.broadcast %cst_8 : f32 to vector<1x256xf32>
    %34 = arith.addf %33, %32 : vector<1x256xf32>
    %c0_9 = arith.constant 0 : index
    %c0_10 = arith.constant 0 : index
    %c0_11 = arith.constant 0 : index
    %35 = vector.load %arg3[%c0_9, %c0_10, %c0_11] : memref<1x1x256xf32, #tpu.memory_space<vmem>>, vector<1x1x256xf32>
    %36 = vector.shape_cast %35 : vector<1x1x256xf32> to vector<1x256xf32>
    %37 = vector.shape_cast %34 : vector<1x256xf32> to vector<1x1x256xf32>
    tpu.vector_store %arg3[%c0_9, %c0_10, %c0_11], %37 {strides = array<i32>} : memref<1x1x256xf32, #tpu.memory_space<vmem>>, vector<1x1x256xf32>,
    return
  }
  func.func @transform_0(%arg0: i32, %arg1: i32) -> (i32, i32, i32) {
    %c0_i32 = arith.constant 0 : i32
    %c0_i32_0 = arith.constant 0 : i32
    return %arg0, %c0_i32, %arg1 : i32, i32, i32
  }
  func.func @transform_1(%arg0: i32, %arg1: i32) -> (i32, i32, i32) {
    %c0_i32 = arith.constant 0 : i32
    %c0_i32_0 = arith.constant 0 : i32
    return %arg0, %c0_i32, %arg1 : i32, i32, i32
  }
}

</mosaic_0001>

<llo_original>
// kernel: tpu_custom_call.1
$region0: #{tpu_custom_call.1}
  #allocation0 [shape = 'u32[]', space=smem, size = 0x4, offset = 0x4, fixed_abs, tag = 'smem constant byte address 0x4 - core index']
  #allocation1 [shape = 'u32[144,128]{1,0:T(1,128)}', space=vmem, size = 0x12000, scoped, tag = 'internal scratch']
  %s0 = inlined_call_operand.hbm [shape: f32[2,16,256], index: 0, kind: input, shape index: {}]
  %s1 = inlined_call_operand.hbm [shape: f32[2,1,256], index: 1, kind: output, shape index: {}]
  %s2 = sld [smem:[#allocation0]]
  $region41: #{tpu_custom_call.1} parent=0
    _
  %s4 = ssub.s32 1, %s2
  %s5 = scalar_select 0, %s4, %s2
  $region1: #{tpu_custom_call.1} parent=0
    #allocation2 [shape = 'u8[32768]{0}', space=vmem, size = 0x8000, scoped, tag = 'input window, operand 0']
    #allocation3 [shape = 's32[2]{0}', space=sflag, size = 0x8, scoped, tag = 'scoped memory for tpu_custom_call.1']
    #allocation4 [shape = 's32[2]{0}', space=sflag, size = 0x8, scoped, tag = 'scoped memory for tpu_custom_call.1']
    #allocation5 [shape = 'u8[2048]{0}', space=vmem, size = 0x800, scoped, tag = 'output window, operand 0']
    %6 = vsyncpa [#allocation3], 0
    %s7 = scalar_lea.sflag [#allocation3], 1
    %8 = vsyncpa %s7, 0
    %9 = vsyncpa [#allocation4], 0
    %s10 = scalar_lea.sflag [#allocation4], 1
    %11 = vsyncpa %s10, 0
    loop: start=0, step=1, limit=4
    $region2: #{tpu_custom_call.1} parent=1 // loop_pre_header
      _
    $region3: #{tpu_custom_call.1} parent=1 // loop_header
      %s13 = sphi 0, %s17
      %p14 = scmp.ge.s32.totalorder %s13, 4
      %s20 = sphi 0, %s32
      %s21 = sphi 0, %s28
      %s22 = sphi 0, %s20
      %s23 = sphi 0, %s21
      %s24 = sphi 0, %s22
      %s25 = sphi 0, %s23
      %s37 = sphi 0, %s39
      %s40 = sphi 0, %s37
      %s41 = sphi 0, %s40
      %s57 = sphi 0, %s41
      %s65 = sphi 0, %s67
      %s68 = sphi 0, %s65
      %s69 = sphi 0, %s68
      %s85 = sphi 0, %s69
    $region4: #{tpu_custom_call.1} parent=1 // loop_header_branch
      %16 = sbr.rel (%p14) target = $region8
    $region5: #{tpu_custom_call.1} parent=1 // loop_body
      %s18 = ssub.s32 %s13, 1
      %s19 = ssub.s32 %s13, 2
      %s26 = sadd.s32 1, %s21
      %p27 = scmp.ge.s32.totalorder %s26, 1
      %s28 = scalar_select %p27, 0, %s26
      %s29 = sadd.s32 1, %s20
      %s30 = scalar_select %p27, %s29, %s20
      %p31 = scmp.ge.s32.totalorder %s30, 2
      %s32 = scalar_select %p31, 0, %s30
      %s33 = ssub.s32 %s20, %s32
      %s34 = ssub.s32 %s21, %s28
      %s35 = sor.u32 %s33, %s34
      %p36 = scmp.eq.s32.totalorder %s35, 0
      %s38 = sadd.s32 %s37, 1
      %s39 = scalar_select %p36, %s37, %s38
      %p42 = pneg %p36
      %p43 = scmp.eq.s32.totalorder %s13, 1
      %p44 = por %p42, %p43
      %p45 = scmp.ne.s32.totalorder %s37, %s40
      %p46 = scmp.eq.s32.totalorder %s13, 0
      %p47 = por %p45, %p46
      %p48 = scmp.ne.s32.totalorder %s37, %s40
      %p49 = scmp.eq.s32.totalorder %s18, 1
      %p50 = por %p48, %p49
      %p51 = scmp.ne.s32.totalorder %s40, %s41
      %p52 = scmp.eq.s32.totalorder %s18, 0
      %p53 = por %p51, %p52
      %p54 = scmp.ne.s32.totalorder %s40, %s41
      %p55 = scmp.eq.s32.totalorder %s19, 1
      %p56 = por %p54, %p55
      %p58 = scmp.ne.s32.totalorder %s41, %s57
      %p59 = scmp.eq.s32.totalorder %s19, 0
      %p60 = por %p58, %p59
      %s61 = ssub.s32 %s20, %s32
      %s62 = ssub.s32 %s21, %s28
      %s63 = sor.u32 %s61, %s62
      %p64 = scmp.eq.s32.totalorder %s63, 0
      %s66 = sadd.s32 %s65, 1
      %s67 = scalar_select %p64, %s65, %s66
      %p70 = pneg %p64
      %p71 = scmp.eq.s32.totalorder %s13, 1
      %p72 = por %p70, %p71
      %p73 = scmp.ne.s32.totalorder %s65, %s68
      %p74 = scmp.eq.s32.totalorder %s13, 0
      %p75 = por %p73, %p74
      %p76 = scmp.ne.s32.totalorder %s65, %s68
      %p77 = scmp.eq.s32.totalorder %s18, 1
      %p78 = por %p76, %p77
      %p79 = scmp.ne.s32.totalorder %s68, %s69
      %p80 = scmp.eq.s32.totalorder %s18, 0
      %p81 = por %p79, %p80
      %p82 = scmp.ne.s32.totalorder %s68, %s69
      %p83 = scmp.eq.s32.totalorder %s19, 1
      %p84 = por %p82, %p83
      %p86 = scmp.ne.s32.totalorder %s69, %s85
      %p87 = scmp.eq.s32.totalorder %s19, 0
      %p88 = por %p86, %p87
      %p89 = scmp.le.s32.totalorder 1, %s13
      %p90 = scmp.lt.s32.totalorder %s13, 3
      %p91 = pnand %p89, %p90
      %p92 = pneg %p91
      // Predicated region
      $region9: #{tpu_custom_call.1} parent=5 // pred_check
        _
      $region10: #{tpu_custom_call.1} parent=5 // pred_check_branch
        %94 = sbr.rel (%p91) target = $region12
      $region11: #{tpu_custom_call.1} parent=5 // pred_region
        %s95 = ssub.s32 %s13, 1
      $region12: #{tpu_custom_call.1} parent=5 // pred_fallthru
        _
      %p96 = scmp.lt.s32.totalorder %s13, 2
      // Predicated region
      $region13: #{tpu_custom_call.1} parent=5 // pred_check
        %p97 = pneg %p96
      $region14: #{tpu_custom_call.1} parent=5 // pred_check_branch
        %99 = sbr.rel (%p97) target = $region16
      $region15: #{tpu_custom_call.1} parent=5 // pred_region
        // Predicated region
        $region17: #{tpu_custom_call.1} parent=15 // pred_check
          %p100 = pneg %p47
        $region18: #{tpu_custom_call.1} parent=15 // pred_check_branch
          %102 = sbr.rel (%p100) target = $region20
        $region19: #{tpu_custom_call.1} parent=15 // pred_region
          %s103 = sand.u32 %s37, 1
          %s104 = scalar_lea.sflag [#allocation3], %s103
          %s105 = sand.u32 %s37, 1
          %s106 = smul.addr %s105, 32
          %s107 = scalar_lea.vmem [#allocation2], %s106
          %s108 = smul.u32 2, %s21
          %s110 = ssub.s32 512, 512
          %111 = vsyncadd %s104, %s110
          %s112 = smul.addr %s20, 4
          %s113 = sadd.s32 %s108, %s112
          %s114 = smul.addr %s113, 128
          %s115 = scalar_lea.hbm %s0, %s114
          %s116 = sshll.u32 %s107, 4
          %s117 = int_to_ptr.vmem [resolvable:$true] %s116
          %122 = dma.hbm_to_vmem [thread:$0]  %s115, 512, %s117, %s104, 256, 256, 16
        $region20: #{tpu_custom_call.1} parent=15 // pred_fallthru
          _
      $region16: #{tpu_custom_call.1} parent=5 // pred_fallthru
        _
      %p123 = scmp.le.s32.totalorder 1, %s13
      %p124 = scmp.lt.s32.totalorder %s13, 3
      %p125 = pnand %p123, %p124
      %p126 = pneg %p125
      // Predicated region
      $region21: #{tpu_custom_call.1} parent=5 // pred_check
        _
      $region22: #{tpu_custom_call.1} parent=5 // pred_check_branch
        %128 = sbr.rel (%p125) target = $region24
      $region23: #{tpu_custom_call.1} parent=5 // pred_region
        %s129 = ssub.s32 %s13, 1
        %s130 = sand.u32 %s40, 1
        %s131 = scalar_lea.sflag [#allocation3], %s130
        %s132 = sand.u32 %s40, 1
        %s133 = smul.addr %s132, 32
        %s134 = scalar_lea.vmem [#allocation2], %s133
        // Predicated region
        $region25: #{tpu_custom_call.1} parent=23 // pred_check
          %p135 = pneg %p53
        $region26: #{tpu_custom_call.1} parent=23 // pred_check_branch
          %137 = sbr.rel (%p135) target = $region28
        $region27: #{tpu_custom_call.1} parent=23 // pred_region
          %138 = dma.done %s131, 512
        $region28: #{tpu_custom_call.1} parent=23 // pred_fallthru
          _
        %s139 = sand.u32 %s40, 1
        %s140 = scalar_lea.sflag [#allocation3], %s139
        %s141 = sand.u32 %s40, 1
        %s142 = smul.addr %s141, 32
        %s143 = scalar_lea.vmem [#allocation2], %s142
        %p144 = pneg %p53
        %p145 = pneg %p50
        %p146 = pneg %p81
        %p147 = pneg %p78
        %s148 = sand.u32 %s68, 1
        %s149 = scalar_lea.sflag [#allocation4], %s148
        %s150 = sand.u32 %s68, 1
        %s151 = smul.addr %s150, 2
        %s152 = scalar_lea.vmem [#allocation5], %s151
        %s153 = smul.u32 2, %s23
        %s154 = smul.u32 2, %s23
        %v155 = vld [vmem:[%s134] sm:$0xff]
        %v156 = vld [vmem:[%s134 + $0x8] sm:$0xff]
        %v157 = vld [vmem:[%s134 + $0x10] sm:$0xff]
        %v158 = vld [vmem:[%s134 + $0x18] sm:$0xff]
        %v159 = vlaneseq
        %v160 = vshrl.u32 %v159, 7
        %v161 = vadd.s32 %v160, 8
        %v162 = vmax.f32 %v155, %v157
        %v163 = vrot.slane %v162, 4
        %v164 = vmax.f32 %v162, %v163
        %v165 = vrot.slane %v164, 2
        %v166 = vmax.f32 %v164, %v165
        %v167 = vrot.slane %v166, 1
        %v168 = vmax.f32 %v166, %v167
        %v169 = vmax.f32 %v156, %v158
        %v170 = vrot.slane %v169, 4
        %v171 = vmax.f32 %v169, %v170
        %v172 = vrot.slane %v171, 2
        %v173 = vmax.f32 %v171, %v172
        %v174 = vrot.slane %v173, 1
        %v175 = vmax.f32 %v173, %v174
        %vm176 = vcmp.eq.f32.partialorder %v155, %v168
        %vm177 = vcmp.eq.f32.partialorder %v156, %v175
        %vm178 = vcmp.eq.f32.partialorder %v157, %v168
        %vm179 = vcmp.eq.f32.partialorder %v158, %v175
        %v180 = vsel %vm176, %v160, 16
        %v181 = vsel %vm177, %v160, 16
        %v182 = vsel %vm178, %v161, 16
        %v183 = vsel %vm179, %v161, 16
        %vm184 = vcmp.lt.s32.totalorder %v180, %v182
        %v185 = vsel %vm184, %v180, %v182
        %v186 = vrot.slane %v185, 4
        %vm187 = vcmp.lt.s32.totalorder %v185, %v186
        %v188 = vsel %vm187, %v185, %v186
        %v189 = vrot.slane %v188, 2
        %vm190 = vcmp.lt.s32.totalorder %v188, %v189
        %v191 = vsel %vm190, %v188, %v189
        %v192 = vrot.slane %v191, 1
        %vm193 = vcmp.lt.s32.totalorder %v191, %v192
        %v194 = vsel %vm193, %v191, %v192
        %vm195 = vcmp.lt.s32.totalorder %v181, %v183
        %v196 = vsel %vm195, %v181, %v183
        %v197 = vrot.slane %v196, 4
        %vm198 = vcmp.lt.s32.totalorder %v196, %v197
        %v199 = vsel %vm198, %v196, %v197
        %v200 = vrot.slane %v199, 2
        %vm201 = vcmp.lt.s32.totalorder %v199, %v200
        %v202 = vsel %vm201, %v199, %v200
        %v203 = vrot.slane %v202, 1
        %vm204 = vcmp.lt.s32.totalorder %v202, %v203
        %v205 = vsel %vm204, %v202, %v203
        %v206 = vsub.s32 %v160, %v194
        %v207 = vsub.s32 %v160, %v205
        %v208 = vsub.s32 %v161, %v194
        %v209 = vsub.s32 %v161, %v205
        %vm210 = vcmp.lt.s32.totalorder %v206, 0
        %v211 = vsub.s32 0, %v206
        %v212 = vsel %vm210, %v211, %v206
        %vm213 = vcmp.lt.s32.totalorder %v207, 0
        %v214 = vsub.s32 0, %v207
        %v215 = vsel %vm213, %v214, %v207
        %vm216 = vcmp.lt.s32.totalorder %v208, 0
        %v217 = vsub.s32 0, %v208
        %v218 = vsel %vm216, %v217, %v208
        %vm219 = vcmp.lt.s32.totalorder %v209, 0
        %v220 = vsub.s32 0, %v209
        %v221 = vsel %vm219, %v220, %v209
        %vm222 = vcmp.le.s32.totalorder %v212, 2
        %vm223 = vcmp.le.s32.totalorder %v215, 2
        %vm224 = vcmp.le.s32.totalorder %v218, 2
        %vm225 = vcmp.le.s32.totalorder %v221, 2
        %v226 = vsub.f32 %v155, %v168
        %v227 = vsub.f32 %v156, %v175
        %v228 = vsub.f32 %v157, %v168
        %v229 = vsub.f32 %v158, %v175
        %v230 = vsel %vm222, %v226, -1e+30
        %v231 = vsel %vm223, %v227, -1e+30
        %v232 = vsel %vm224, %v228, -1e+30
        %v233 = vsel %vm225, %v229, -1e+30
        %v234 = vmul.f32 %v230, 1.442695
        %v235 = vpow.pop %v234
        %v236 = vmul.f32 %v231, 1.442695
        %v237 = vpow.pop %v236
        %v238 = vmul.f32 %v232, 1.442695
        %v239 = vpow.pop %v238
        %v240 = vmul.f32 %v233, 1.442695
        %v241 = vpow.pop %v240
        %v242 = vadd.f32 %v235, %v239
        %v243 = vrot.slane %v242, 4
        %v244 = vadd.f32 %v242, %v243
        %v245 = vrot.slane %v244, 2
        %v246 = vadd.f32 %v244, %v245
        %v247 = vrot.slane %v246, 1
        %v248 = vadd.f32 %v246, %v247
        %v249 = vadd.f32 %v237, %v241
        %v250 = vrot.slane %v249, 4
        %v251 = vadd.f32 %v249, %v250
        %v252 = vrot.slane %v251, 2
        %v253 = vadd.f32 %v251, %v252
        %v254 = vrot.slane %v253, 1
        %v255 = vadd.f32 %v253, %v254
        %v256 = vcvt.s32.f32 %v160
        %v257 = vcvt.s32.f32 %v161
        %v258 = vmul.f32 %v235, %v256
        %v259 = vmul.f32 %v237, %v256
        %v260 = vmul.f32 %v239, %v257
        %v261 = vmul.f32 %v241, %v257
        %v262 = vadd.f32 %v258, %v260
        %v263 = vrot.slane %v262, 4
        %v264 = vadd.f32 %v262, %v263
        %v265 = vrot.slane %v264, 2
        %v266 = vadd.f32 %v264, %v265
        %v267 = vrot.slane %v266, 1
        %v268 = vadd.f32 %v266, %v267
        %v269 = vadd.f32 %v259, %v261
        %v270 = vrot.slane %v269, 4
        %v271 = vadd.f32 %v269, %v270
        %v272 = vrot.slane %v271, 2
        %v273 = vadd.f32 %v271, %v272
        %v274 = vrot.slane %v273, 1
        %v275 = vadd.f32 %v273, %v274
        %v276 = vrcp.pop %v248
        %v277 = vrcp.pop %v255
        %v278 = vmul.f32 %v268, %v276
        %v279 = vmul.f32 %v275, %v277
        %v280 = vadd.f32 %v278, 0.0
        %v281 = vadd.f32 %v279, 0.0
        %v284 = vcombine.low %v280, %v281
        %v286 = vunpack.c.l.s4 1966171168
        %v287 = vunpack.c.0.s8 %v286
        %v288 = vlaneseq
        %v289 = vshrl.u32 %v288, 7
        %v290 = vsub.s32 %v287, %v289
        %v291 = vrot.slane %v284, %v290
        %v293 = vunpack.c.l.s4 1966171168
        %v294 = vunpack.c.0.s8 %v293
        %v295 = vlaneseq
        %v296 = vshrl.u32 %v295, 7
        %v297 = vsub.s32 %v294, %v296
        %v298 = vrot.slane %v291, %v297
        %v300 = vlaneseq
        %vm301 = vcmp.ge.s32.totalorder %v300, 0
        %vm302 = vcmp.lt.s32.totalorder %v300, 256
        %vm303 = vmand %vm301, %vm302
        %304 = vst.msk [vmem:[%s152] sm:$0x3] %vm303, %v298
        %s305 = sand.u32 %s68, 1
        %s306 = scalar_lea.sflag [#allocation4], %s305
        %s307 = sand.u32 %s68, 1
        %s308 = smul.addr %s307, 2
        %s309 = scalar_lea.vmem [#allocation5], %s308
        // Predicated region
        $region29: #{tpu_custom_call.1} parent=23 // pred_check
          %p310 = pneg %p78
        $region30: #{tpu_custom_call.1} parent=23 // pred_check_branch
          %312 = sbr.rel (%p310) target = $region32
        $region31: #{tpu_custom_call.1} parent=23 // pred_region
          %s313 = smul.u32 2, %s23
          %s315 = ssub.s32 32, 32
          %316 = vsyncadd %s306, %s315
          %s317 = smul.addr %s22, 2
          %s318 = sadd.s32 %s313, %s317
          %s319 = smul.addr %s318, 16
          %s320 = scalar_lea.hbm %s1, %s319
          %s322 = sshll.u32 %s309, 4
          %s323 = int_to_ptr.vmem [resolvable:$true] %s322
          %325 = dma.vmem_to_hbm [thread:$0]  %s323, 32, %s320, %s306
        $region32: #{tpu_custom_call.1} parent=23 // pred_fallthru
          _
      $region24: #{tpu_custom_call.1} parent=5 // pred_fallthru
        _
      %p326 = scmp.le.s32.totalorder 2, %s13
      // Predicated region
      $region33: #{tpu_custom_call.1} parent=5 // pred_check
        %p327 = pneg %p326
      $region34: #{tpu_custom_call.1} parent=5 // pred_check_branch
        %329 = sbr.rel (%p327) target = $region36
      $region35: #{tpu_custom_call.1} parent=5 // pred_region
        %s330 = ssub.s32 %s13, 2
        // Predicated region
        $region37: #{tpu_custom_call.1} parent=35 // pred_check
          %p331 = pneg %p84
        $region38: #{tpu_custom_call.1} parent=35 // pred_check_branch
          %333 = sbr.rel (%p331) target = $region40
        $region39: #{tpu_custom_call.1} parent=35 // pred_region
          %s334 = sand.u32 %s69, 1
          %s335 = scalar_lea.sflag [#allocation4], %s334
          %s336 = sand.u32 %s69, 1
          %s337 = smul.addr %s336, 2
          %s338 = scalar_lea.vmem [#allocation5], %s337
          %339 = dma.done %s335, 32
        $region40: #{tpu_custom_call.1} parent=35 // pred_fallthru
          _
      $region36: #{tpu_custom_call.1} parent=5 // pred_fallthru
        _
    $region6: #{tpu_custom_call.1} parent=1 // loop_footer
      %s17 = sadd.s32 1, %s13
    $region7: #{tpu_custom_call.1} parent=1 // loop_footer_branch
      %12 = sbr.rel target = $region3
    $region8: #{tpu_custom_call.1} parent=1 // loop_exit
      _
    %340 = vsyncpa [#allocation3], 1
    %s341 = scalar_lea.sflag [#allocation3], 1
    %342 = vsyncpa %s341, 1
    %343 = vsyncpa [#allocation4], 1
    %s344 = scalar_lea.sflag [#allocation4], 1
    %345 = vsyncpa %s344, 1

</llo_original>
